<compile_context>
chip_gen: v7x
topology: tpu7x:2x2x1
jax: 0.10.0
libtpu: 0.0.40
codegen_flags: <defaults>
</compile_context>

<pallas_src>
import math
import functools

import jax
import jax.numpy as jnp
from jax.experimental import pallas as pl
from jax.experimental.pallas import tpu as pltpu


_LANE = 128
# Cap on elements per input tile: with F=2 f32 the live double-buffered bytes
# are ~2*(1+2F)*4*tile_elems = 40*tile_elems -> 512K elems ~= 20 MiB, safely
# under v7x's 64 MiB physical VMEM and the raised scoped limit elsewhere.
_MAX_TILE_ELEMS = 512 * 1024
_VMEM_LIMIT_BYTES = 48 * 1024 * 1024


def _make_freqs(first=5.0, last=6.0, step=1.0):
    # torch.arange(first, last + 1e-8, step); freqs = 2**exp * 2*pi.
    n = int(math.floor((last + 1e-8 - first) / step)) + 1
    return tuple(float((2.0 ** (first + i * step)) * 2.0 * math.pi)
                 for i in range(n))


def _choose_slab(n):
    """Map a flat length-n vector to an (R, L) slab with L a multiple of 128."""
    # Prefer no-padding layouts with wide lanes and R a multiple of 8.
    for lanes in (2048, 1024, 512, 256, 128):
        if n % lanes == 0 and (n // lanes) % 8 == 0:
            return n // lanes, lanes
    # No-padding layouts where the full R fits in a single block
    # (full-extent exemption from the multiple-of-8 sublane rule).
    for lanes in (2048, 1024, 512, 256, 128):
        if n % lanes == 0 and n <= _MAX_TILE_ELEMS:
            return n // lanes, lanes
    # Fall back: L = 128, pad R up to a multiple of 8.
    rows = ((pl.cdiv(n, _LANE) + 7) // 8) * 8
    return rows, _LANE


def _choose_row_tile(rows, lanes):
    """Largest row tile (multiple of 8 dividing `rows`) under the VMEM cap."""
    max_rows = max(8, _MAX_TILE_ELEMS // lanes)
    if rows <= max_rows:
        return rows
    if rows % 8 == 0:
        best, d = 8, 8
        while d <= max_rows:
            if rows % d == 0:
                best = d
            d += 8
        return best
    return rows  # defensive fallback: single full-extent block


def _fourier_kernel(x_ref, o_ref, *, freqs):
    # x_ref: (tR, L) lane-dense slab; o_ref: (2F, tR, L).
    x = x_ref[...].astype(jnp.float32)       # upcast once (matters for bf16)
    F = len(freqs)
    for fi, fr in enumerate(freqs):          # F is tiny (2) -> static unroll
        feat = fr * x                        # VPU
        o_ref[fi] = jnp.sin(feat).astype(o_ref.dtype)        # EUP + VPU
        o_ref[F + fi] = jnp.cos(feat).astype(o_ref.dtype)


def fourier_features(x, first=5.0, last=6.0, step=1.0):
    """Pallas TPU implementation of FourierFeatures.forward (x.ndim >= 2)."""
    assert x.ndim >= 2
    freqs = _make_freqs(first, last, step)
    F = len(freqs)
    B = x.shape[0]
    n = math.prod(x.shape[1:])

    rows, lanes = _choose_slab(n)
    n_pad = rows * lanes
    x_flat = x.reshape(B, n)
    if n_pad != n:
        x_flat = jnp.pad(x_flat, ((0, 0), (0, n_pad - n)))
    x_slab = x_flat.reshape(B, rows, lanes)

    t_rows = _choose_row_tile(rows, lanes)
    grid = (B, rows // t_rows)

    itemsize = jnp.dtype(x.dtype).itemsize
    cost = pl.CostEstimate(
        flops=F * B * n_pad,
        transcendentals=2 * F * B * n_pad,
        bytes_accessed=(1 + 2 * F) * B * n_pad * itemsize,
    )

    out_slab = pl.pallas_call(
        functools.partial(_fourier_kernel, freqs=freqs),
        out_shape=jax.ShapeDtypeStruct((B, 2 * F, rows, lanes), x.dtype),
        grid=grid,
        in_specs=[pl.BlockSpec((None, t_rows, lanes), lambda b, r: (b, r, 0))],
        out_specs=pl.BlockSpec((None, 2 * F, t_rows, lanes),
                               lambda b, r: (b, 0, r, 0)),
        compiler_params=pltpu.CompilerParams(
            dimension_semantics=("parallel", "parallel"),
            vmem_limit_bytes=_VMEM_LIMIT_BYTES,
        ),
        cost_estimate=cost,
    )(x_slab)

    out_flat = out_slab.reshape(B, 2 * F, n_pad)
    if n_pad != n:
        out_flat = out_flat[:, :, :n]
    return out_flat.reshape(B, 2 * F * x.shape[1], *x.shape[2:])


def _reference(x, first=5.0, last=6.0, step=1.0):
    # Pure-JAX reference mirroring the PyTorch forward (for verification).
    freqs = jnp.asarray(_make_freqs(first, last, step), x.dtype)
    f = freqs.reshape(-1, *([1] * (x.ndim - 1)))           # (F,1,...,1)
    feat = f * x[:, None]                                   # (B,F,C,*spatial)
    feat = feat.reshape(x.shape[0], -1, *x.shape[2:])       # (B,F*C,*spatial)
    return jnp.concatenate([jnp.sin(feat), jnp.cos(feat)], axis=1)


if __name__ == "__main__":
    key = jax.random.PRNGKey(0)

    # Primary test: NCHW input (no padding path, slab = (8, 128)).
    x = jax.random.normal(key, (2, 4, 16, 16), dtype=jnp.float32)
    out = jax.block_until_ready(fourier_features(x))
    ref = _reference(x)
    assert out.shape == (2, 16, 16, 16), out.shape
    assert jnp.allclose(out, ref, atol=1e-5, rtol=1e-5), "mismatch vs reference"

    # Secondary test: shape that exercises the zero-padding path.
    x2 = jax.random.normal(jax.random.PRNGKey(1), (2, 3, 8, 8), dtype=jnp.float32)
    out2 = jax.block_until_ready(fourier_features(x2))
    ref2 = _reference(x2)
    assert out2.shape == (2, 12, 8, 8), out2.shape
    assert jnp.allclose(out2, ref2, atol=1e-5, rtol=1e-5), "mismatch vs reference (padded path)"

    print("KERNEL_OK")
</pallas_src>

<mosaic_0001>
module attributes {stable_mosaic.version = 11 : i64} {
  func.func @_fourier_kernel(%arg0: i32, %arg1: i32, %arg2: memref<1x8x128xf32, #tpu.memory_space<vmem>>, %arg3: memref<1x4x8x128xf32, #tpu.memory_space<vmem>>) attributes {dimension_semantics = [#tpu.dimension_semantics<parallel>, #tpu.dimension_semantics<parallel>], iteration_bounds = array<i64: 2, 1>, scalar_prefetch = 0 : i64, scratch_operands = 0 : i64, tpu.core_type = #tpu.core_type<tc>, window_params = [{transform_indices = @transform_0, window_bounds = array<i64: 1, 8, 128>}, {transform_indices = @transform_1, window_bounds = array<i64: 1, 4, 8, 128>}]} {
    %c0 = arith.constant 0 : index
    %c0_0 = arith.constant 0 : index
    %c0_1 = arith.constant 0 : index
    %0 = vector.load %arg2[%c0, %c0_0, %c0_1] : memref<1x8x128xf32, #tpu.memory_space<vmem>>, vector<1x8x128xf32>
    %1 = vector.shape_cast %0 : vector<1x8x128xf32> to vector<8x128xf32>
    %cst = arith.constant 201.061935 : f32
    %2 = vector.broadcast %cst : f32 to vector<8x128xf32>
    %3 = arith.mulf %2, %1 : vector<8x128xf32>
    %4 = math.sin %3 : vector<8x128xf32>
    %c0_2 = arith.constant 0 : index
    %c0_3 = arith.constant 0 : index
    %c0_4 = arith.constant 0 : index
    %c0_5 = arith.constant 0 : index
    %5 = vector.load %arg3[%c0_2, %c0_3, %c0_4, %c0_5] : memref<1x4x8x128xf32, #tpu.memory_space<vmem>>, vector<1x1x8x128xf32>
    %6 = vector.shape_cast %5 : vector<1x1x8x128xf32> to vector<8x128xf32>
    %7 = vector.shape_cast %4 : vector<8x128xf32> to vector<1x1x8x128xf32>
    tpu.vector_store %arg3[%c0_2, %c0_3, %c0_4, %c0_5], %7 {strides = array<i32>} : memref<1x4x8x128xf32, #tpu.memory_space<vmem>>, vector<1x1x8x128xf32>,
    %8 = math.cos %3 : vector<8x128xf32>
    %c0_6 = arith.constant 0 : index
    %c2 = arith.constant 2 : index
    %c0_7 = arith.constant 0 : index
    %c0_8 = arith.constant 0 : index
    %9 = vector.load %arg3[%c0_6, %c2, %c0_7, %c0_8] : memref<1x4x8x128xf32, #tpu.memory_space<vmem>>, vector<1x1x8x128xf32>
    %10 = vector.shape_cast %9 : vector<1x1x8x128xf32> to vector<8x128xf32>
    %11 = vector.shape_cast %8 : vector<8x128xf32> to vector<1x1x8x128xf32>
    tpu.vector_store %arg3[%c0_6, %c2, %c0_7, %c0_8], %11 {strides = array<i32>} : memref<1x4x8x128xf32, #tpu.memory_space<vmem>>, vector<1x1x8x128xf32>,
    %cst_9 = arith.constant 402.123871 : f32
    %12 = vector.broadcast %cst_9 : f32 to vector<8x128xf32>
    %13 = arith.mulf %12, %1 : vector<8x128xf32>
    %14 = math.sin %13 : vector<8x128xf32>
    %c0_10 = arith.constant 0 : index
    %c1 = arith.constant 1 : index
    %c0_11 = arith.constant 0 : index
    %c0_12 = arith.constant 0 : index
    %15 = vector.load %arg3[%c0_10, %c1, %c0_11, %c0_12] : memref<1x4x8x128xf32, #tpu.memory_space<vmem>>, vector<1x1x8x128xf32>
    %16 = vector.shape_cast %15 : vector<1x1x8x128xf32> to vector<8x128xf32>
    %17 = vector.shape_cast %14 : vector<8x128xf32> to vector<1x1x8x128xf32>
    tpu.vector_store %arg3[%c0_10, %c1, %c0_11, %c0_12], %17 {strides = array<i32>} : memref<1x4x8x128xf32, #tpu.memory_space<vmem>>, vector<1x1x8x128xf32>,
    %18 = math.cos %13 : vector<8x128xf32>
    %c0_13 = arith.constant 0 : index
    %c3 = arith.constant 3 : index
    %c0_14 = arith.constant 0 : index
    %c0_15 = arith.constant 0 : index
    %19 = vector.load %arg3[%c0_13, %c3, %c0_14, %c0_15] : memref<1x4x8x128xf32, #tpu.memory_space<vmem>>, vector<1x1x8x128xf32>
    %20 = vector.shape_cast %19 : vector<1x1x8x128xf32> to vector<8x128xf32>
    %21 = vector.shape_cast %18 : vector<8x128xf32> to vector<1x1x8x128xf32>
    tpu.vector_store %arg3[%c0_13, %c3, %c0_14, %c0_15], %21 {strides = array<i32>} : memref<1x4x8x128xf32, #tpu.memory_space<vmem>>, vector<1x1x8x128xf32>,
    return
  }
  func.func @transform_0(%arg0: i32, %arg1: i32) -> (i32, i32, i32) {
    %c0_i32 = arith.constant 0 : i32
    %c0_i32_0 = arith.constant 0 : i32
    return %arg0, %arg1, %c0_i32 : i32, i32, i32
  }
  func.func @transform_1(%arg0: i32, %arg1: i32) -> (i32, i32, i32, i32) {
    %c0_i32 = arith.constant 0 : i32
    %c0_i32_0 = arith.constant 0 : i32
    %c0_i32_1 = arith.constant 0 : i32
    return %arg0, %c0_i32, %arg1, %c0_i32_0 : i32, i32, i32, i32
  }
}

</mosaic_0001>

<llo_original>
// kernel: tpu_custom_call.1
$region0: #{tpu_custom_call.1}
  #allocation0 [shape = 'u32[]', space=smem, size = 0x4, offset = 0x4, fixed_abs, tag = 'smem constant byte address 0x4 - core index']
  #allocation1 [shape = 'u32[144,128]{1,0:T(1,128)}', space=vmem, size = 0x12000, scoped, tag = 'internal scratch']
  %s0 = inlined_call_operand.hbm [shape: f32[2,8,128], index: 0, kind: input, shape index: {}]
  %s1 = inlined_call_operand.hbm [shape: f32[2,4,8,128], index: 1, kind: output, shape index: {}]
  %s2 = sld [smem:[#allocation0]]
  $region41: #{tpu_custom_call.1} parent=0
    _
  %s4 = ssub.s32 1, %s2
  %s5 = scalar_select 0, %s4, %s2
  $region1: #{tpu_custom_call.1} parent=0
    #allocation2 [shape = 'u8[8192]{0}', space=vmem, size = 0x2000, scoped, tag = 'input window, operand 0']
    #allocation3 [shape = 's32[2]{0}', space=sflag, size = 0x8, scoped, tag = 'scoped memory for tpu_custom_call.1']
    #allocation4 [shape = 's32[2]{0}', space=sflag, size = 0x8, scoped, tag = 'scoped memory for tpu_custom_call.1']
    #allocation5 [shape = 'u8[32768]{0}', space=vmem, size = 0x8000, scoped, tag = 'output window, operand 0']
    %6 = vsyncpa [#allocation3], 0
    %s7 = scalar_lea.sflag [#allocation3], 1
    %8 = vsyncpa %s7, 0
    %9 = vsyncpa [#allocation4], 0
    %s10 = scalar_lea.sflag [#allocation4], 1
    %11 = vsyncpa %s10, 0
    loop: start=0, step=1, limit=4
    $region2: #{tpu_custom_call.1} parent=1 // loop_pre_header
      _
    $region3: #{tpu_custom_call.1} parent=1 // loop_header
      %s13 = sphi 0, %s17
      %p14 = scmp.ge.s32.totalorder %s13, 4
      %s20 = sphi 0, %s32
      %s21 = sphi 0, %s28
      %s22 = sphi 0, %s20
      %s23 = sphi 0, %s21
      %s24 = sphi 0, %s22
      %s25 = sphi 0, %s23
      %s37 = sphi 0, %s39
      %s40 = sphi 0, %s37
      %s41 = sphi 0, %s40
      %s57 = sphi 0, %s41
      %s65 = sphi 0, %s67
      %s68 = sphi 0, %s65
      %s69 = sphi 0, %s68
      %s85 = sphi 0, %s69
    $region4: #{tpu_custom_call.1} parent=1 // loop_header_branch
      %16 = sbr.rel (%p14) target = $region8
    $region5: #{tpu_custom_call.1} parent=1 // loop_body
      %s18 = ssub.s32 %s13, 1
      %s19 = ssub.s32 %s13, 2
      %s26 = sadd.s32 1, %s21
      %p27 = scmp.ge.s32.totalorder %s26, 1
      %s28 = scalar_select %p27, 0, %s26
      %s29 = sadd.s32 1, %s20
      %s30 = scalar_select %p27, %s29, %s20
      %p31 = scmp.ge.s32.totalorder %s30, 2
      %s32 = scalar_select %p31, 0, %s30
      %s33 = ssub.s32 %s20, %s32
      %s34 = ssub.s32 %s21, %s28
      %s35 = sor.u32 %s33, %s34
      %p36 = scmp.eq.s32.totalorder %s35, 0
      %s38 = sadd.s32 %s37, 1
      %s39 = scalar_select %p36, %s37, %s38
      %p42 = pneg %p36
      %p43 = scmp.eq.s32.totalorder %s13, 1
      %p44 = por %p42, %p43
      %p45 = scmp.ne.s32.totalorder %s37, %s40
      %p46 = scmp.eq.s32.totalorder %s13, 0
      %p47 = por %p45, %p46
      %p48 = scmp.ne.s32.totalorder %s37, %s40
      %p49 = scmp.eq.s32.totalorder %s18, 1
      %p50 = por %p48, %p49
      %p51 = scmp.ne.s32.totalorder %s40, %s41
      %p52 = scmp.eq.s32.totalorder %s18, 0
      %p53 = por %p51, %p52
      %p54 = scmp.ne.s32.totalorder %s40, %s41
      %p55 = scmp.eq.s32.totalorder %s19, 1
      %p56 = por %p54, %p55
      %p58 = scmp.ne.s32.totalorder %s41, %s57
      %p59 = scmp.eq.s32.totalorder %s19, 0
      %p60 = por %p58, %p59
      %s61 = ssub.s32 %s20, %s32
      %s62 = ssub.s32 %s21, %s28
      %s63 = sor.u32 %s61, %s62
      %p64 = scmp.eq.s32.totalorder %s63, 0
      %s66 = sadd.s32 %s65, 1
      %s67 = scalar_select %p64, %s65, %s66
      %p70 = pneg %p64
      %p71 = scmp.eq.s32.totalorder %s13, 1
      %p72 = por %p70, %p71
      %p73 = scmp.ne.s32.totalorder %s65, %s68
      %p74 = scmp.eq.s32.totalorder %s13, 0
      %p75 = por %p73, %p74
      %p76 = scmp.ne.s32.totalorder %s65, %s68
      %p77 = scmp.eq.s32.totalorder %s18, 1
      %p78 = por %p76, %p77
      %p79 = scmp.ne.s32.totalorder %s68, %s69
      %p80 = scmp.eq.s32.totalorder %s18, 0
      %p81 = por %p79, %p80
      %p82 = scmp.ne.s32.totalorder %s68, %s69
      %p83 = scmp.eq.s32.totalorder %s19, 1
      %p84 = por %p82, %p83
      %p86 = scmp.ne.s32.totalorder %s69, %s85
      %p87 = scmp.eq.s32.totalorder %s19, 0
      %p88 = por %p86, %p87
      %p89 = scmp.le.s32.totalorder 1, %s13
      %p90 = scmp.lt.s32.totalorder %s13, 3
      %p91 = pnand %p89, %p90
      %p92 = pneg %p91
      // Predicated region
      $region9: #{tpu_custom_call.1} parent=5 // pred_check
        _
      $region10: #{tpu_custom_call.1} parent=5 // pred_check_branch
        %94 = sbr.rel (%p91) target = $region12
      $region11: #{tpu_custom_call.1} parent=5 // pred_region
        %s95 = ssub.s32 %s13, 1
      $region12: #{tpu_custom_call.1} parent=5 // pred_fallthru
        _
      %p96 = scmp.lt.s32.totalorder %s13, 2
      // Predicated region
      $region13: #{tpu_custom_call.1} parent=5 // pred_check
        %p97 = pneg %p96
      $region14: #{tpu_custom_call.1} parent=5 // pred_check_branch
        %99 = sbr.rel (%p97) target = $region16
      $region15: #{tpu_custom_call.1} parent=5 // pred_region
        // Predicated region
        $region17: #{tpu_custom_call.1} parent=15 // pred_check
          %p100 = pneg %p47
        $region18: #{tpu_custom_call.1} parent=15 // pred_check_branch
          %102 = sbr.rel (%p100) target = $region20
        $region19: #{tpu_custom_call.1} parent=15 // pred_region
          %s103 = sand.u32 %s37, 1
          %s104 = scalar_lea.sflag [#allocation3], %s103
          %s105 = sand.u32 %s37, 1
          %s106 = smul.addr %s105, 8
          %s107 = scalar_lea.vmem [#allocation2], %s106
          %s109 = ssub.s32 128, 128
          %110 = vsyncadd %s104, %s109
          %s111 = sadd.s32 %s21, %s20
          %s112 = smul.addr %s111, 128
          %s113 = scalar_lea.hbm %s0, %s112
          %s115 = sshll.u32 %s107, 4
          %s116 = int_to_ptr.vmem [resolvable:$true] %s115
          %118 = dma.hbm_to_vmem [thread:$0]  %s113, 128, %s116, %s104
        $region20: #{tpu_custom_call.1} parent=15 // pred_fallthru
          _
      $region16: #{tpu_custom_call.1} parent=5 // pred_fallthru
        _
      %p119 = scmp.le.s32.totalorder 1, %s13
      %p120 = scmp.lt.s32.totalorder %s13, 3
      %p121 = pnand %p119, %p120
      %p122 = pneg %p121
      // Predicated region
      $region21: #{tpu_custom_call.1} parent=5 // pred_check
        _
      $region22: #{tpu_custom_call.1} parent=5 // pred_check_branch
        %124 = sbr.rel (%p121) target = $region24
      $region23: #{tpu_custom_call.1} parent=5 // pred_region
        %s125 = ssub.s32 %s13, 1
        %s126 = sand.u32 %s40, 1
        %s127 = scalar_lea.sflag [#allocation3], %s126
        %s128 = sand.u32 %s40, 1
        %s129 = smul.addr %s128, 8
        %s130 = scalar_lea.vmem [#allocation2], %s129
        // Predicated region
        $region25: #{tpu_custom_call.1} parent=23 // pred_check
          %p131 = pneg %p53
        $region26: #{tpu_custom_call.1} parent=23 // pred_check_branch
          %133 = sbr.rel (%p131) target = $region28
        $region27: #{tpu_custom_call.1} parent=23 // pred_region
          %134 = dma.done %s127, 128
        $region28: #{tpu_custom_call.1} parent=23 // pred_fallthru
          _
        %s135 = sand.u32 %s40, 1
        %s136 = scalar_lea.sflag [#allocation3], %s135
        %s137 = sand.u32 %s40, 1
        %s138 = smul.addr %s137, 8
        %s139 = scalar_lea.vmem [#allocation2], %s138
        %p140 = pneg %p53
        %p141 = pneg %p50
        %p142 = pneg %p81
        %p143 = pneg %p78
        %s144 = sand.u32 %s68, 1
        %s145 = scalar_lea.sflag [#allocation4], %s144
        %s146 = sand.u32 %s68, 1
        %s147 = smul.addr %s146, 32
        %s148 = scalar_lea.vmem [#allocation5], %s147
        %v149 = vld [vmem:[%s130] sm:$0xff]
        %v150 = vmul.f32 %v149, 201.06194
        %v151 = vand.u32 2147483647, %v150
        %vm152 = vcmp.le.f32.partialorder %v151, 0.7853982
        %vm153 = vcmp.lt.s32.totalorder %v150, 0
        %v154 = vand.u32 %v150, 2139095040
        %v155 = vshrl.u32 %v154, 23
        %v156 = vsub.s32 %v155, 127
        %v157 = vand.u32 2147483647, %v150
        %v158 = vand.u32 %v157, 8388607
        %v159 = vor.u32 %v158, 8388608
        %v160 = vsub.s32 0, %v159
        %v161 = vadd.s32 %v156, 1
        %vm162 = vcmp.gt.s32.totalorder %v161, 0
        %v163 = vsel %vm162, %v161, 0
        %v164 = vshrl.u32 %v163, 5
        %v165 = vand.u32 %v163, 31
        %v166 = vsub.s32 32, %v165
        %v167 = vshrl.u32 683565275, %v166
        %v168 = vshll.u32 683565275, %v165
        %v169 = vshrl.u32 2475754826, %v166
        %v170 = vor.u32 %v168, %v169
        %v171 = vshll.u32 2475754826, %v165
        %v172 = vshrl.u32 2131351028, %v166
        %v173 = vor.u32 %v171, %v172
        %v174 = vshll.u32 2131351028, %v165
        %v175 = vshrl.u32 2102212464, %v166
        %v176 = vor.u32 %v174, %v175
        %v177 = vshll.u32 2102212464, %v165
        %v178 = vshrl.u32 920167782, %v166
        %v179 = vor.u32 %v177, %v178
        %v180 = vshll.u32 920167782, %v165
        %v181 = vshrl.u32 1326507024, %v166
        %v182 = vor.u32 %v180, %v181
        %vm183 = vcmp.lt.s32.totalorder %v164, 1
        %vm184 = vcmp.lt.s32.totalorder %v164, 2
        %vm185 = vcmp.lt.s32.totalorder %v164, 3
        %vm186 = vcmp.lt.s32.totalorder %v164, 4
        %v187 = vsel %vm183, %v167, %v170
        %v188 = vsel %vm186, %v176, 2102212464
        %v189 = vsel %vm185, %v173, %v188
        %v190 = vsel %vm184, %v187, %v189
        %v191 = vsel %vm183, %v170, %v173
        %v192 = vsel %vm186, %v179, 920167782
        %v193 = vsel %vm185, %v176, %v192
        %v194 = vsel %vm184, %v191, %v193
        %v195 = vsel %vm183, %v173, %v176
        %v196 = vsel %vm186, %v182, 1326507024
        %v197 = vsel %vm185, %v179, %v196
        %v198 = vsel %vm184, %v195, %v197
        %v199 = vshll.u32 %v159, 8
        %v200 = vmul.u32.u64.compose %v199, %v198
        %v201 = vextract.low.u32 %v200
        %v202 = vextract.high.u32 %v200
        %v203 = vmul.u32.u64.compose %v199, %v194
        %v204 = vextract.low.u32 %v203
        %v205 = vextract.high.u32 %v203
        %v206 = vmul.u32 %v199, %v190
        %v207 = vadd.s32 %v202, %v204
        %vm208 = vc.u32 %v202, %v204
        %v209 = vadd.s32 %v205, 1
        %v210 = vsel %vm208, %v209, %v205
        %v211 = vadd.s32 %v206, %v210
        %v212 = vadd.s32 %v211, 536870912
        %v213 = vshrl.u32 %v212, 30
        %v214 = vshll.u32 %v213, 30
        %v215 = vsub.s32 %v211, %v214
        %vm216 = vcmp.lt.s32.totalorder %v215, 0
        %v217 = vsub.s32 0, %v215
        %v218 = vsel %vm216, %v217, %v215
        %v219 = vclz %v218
        %v220 = vsub.s32 %v219, 2
        %vm221 = vcmp.gt.s32.totalorder 0, %v220
        %v222 = vsel %vm221, 0, %v220
        %v223 = vsub.s32 32, %v222
        %v224 = vshll.u32 %v215, %v222
        %v225 = vshrl.u32 %v207, %v223
        %v226 = vor.u32 %v224, %v225
        %v227 = vsub.s32 4294967266, %v222
        %v228 = vadd.s32 %v227, 127
        %v229 = vshll.u32 %v228, 23
        %v230 = vor.u32 4788187, %v229
        %v231 = vand.u32 2147483647, %v230
        %v233 = vcvt.s32.f32 %v226
        %v234 = vmul.f32 %v233, %v231
        %v235 = vxor.u32 %v234, 2147483648
        %v236 = vsel %vm153, %v235, %v234
        %v237 = vsub.s32 4, %v213
        %v238 = vsel %vm153, %v237, %v213
        %v239 = vsel %vm152, %v150, %v236
        %v240 = vsel %vm152, 0, %v238
        %v241 = vcosq.f32.pop %v239
        %v242 = vsinq.f32.pop %v239
        %vm243 = vweird.f32 %v150
        %v244 = vadd.s32 %v240, 3
        %v245 = vand.u32 %v244, 3
        %vm246 = vcmp.lt.s32.totalorder %v245, 2
        %vm247 = vcmp.eq.s32.totalorder %v245, 0
        %v248 = vxor.u32 %v242, 2147483648
        %v249 = vsel %vm247, %v241, %v248
        %vm250 = vcmp.eq.s32.totalorder %v245, 2
        %v251 = vxor.u32 %v241, 2147483648
        %v252 = vsel %vm250, %v251, %v242
        %v253 = vsel %vm246, %v249, %v252
        %v254 = vsel %vm243, nan, %v253
        %255 = vst [vmem:[%s148] sm:$0xff] %v254
        %v256 = vand.u32 2147483647, %v150
        %vm257 = vcmp.le.f32.partialorder %v256, 0.7853982
        %vm258 = vcmp.lt.s32.totalorder %v150, 0
        %v259 = vand.u32 %v150, 2139095040
        %v260 = vshrl.u32 %v259, 23
        %v261 = vsub.s32 %v260, 127
        %v262 = vand.u32 2147483647, %v150
        %v263 = vand.u32 %v262, 8388607
        %v264 = vor.u32 %v263, 8388608
        %v265 = vsub.s32 0, %v264
        %v266 = vadd.s32 %v261, 1
        %vm267 = vcmp.gt.s32.totalorder %v266, 0
        %v268 = vsel %vm267, %v266, 0
        %v269 = vshrl.u32 %v268, 5
        %v270 = vand.u32 %v268, 31
        %v271 = vsub.s32 32, %v270
        %v272 = vshrl.u32 683565275, %v271
        %v273 = vshll.u32 683565275, %v270
        %v274 = vshrl.u32 2475754826, %v271
        %v275 = vor.u32 %v273, %v274
        %v276 = vshll.u32 2475754826, %v270
        %v277 = vshrl.u32 2131351028, %v271
        %v278 = vor.u32 %v276, %v277
        %v279 = vshll.u32 2131351028, %v270
        %v280 = vshrl.u32 2102212464, %v271
        %v281 = vor.u32 %v279, %v280
        %v282 = vshll.u32 2102212464, %v270
        %v283 = vshrl.u32 920167782, %v271
        %v284 = vor.u32 %v282, %v283
        %v285 = vshll.u32 920167782, %v270
        %v286 = vshrl.u32 1326507024, %v271
        %v287 = vor.u32 %v285, %v286
        %vm288 = vcmp.lt.s32.totalorder %v269, 1
        %vm289 = vcmp.lt.s32.totalorder %v269, 2
        %vm290 = vcmp.lt.s32.totalorder %v269, 3
        %vm291 = vcmp.lt.s32.totalorder %v269, 4
        %v292 = vsel %vm288, %v272, %v275
        %v293 = vsel %vm291, %v281, 2102212464
        %v294 = vsel %vm290, %v278, %v293
        %v295 = vsel %vm289, %v292, %v294
        %v296 = vsel %vm288, %v275, %v278
        %v297 = vsel %vm291, %v284, 920167782
        %v298 = vsel %vm290, %v281, %v297
        %v299 = vsel %vm289, %v296, %v298
        %v300 = vsel %vm288, %v278, %v281
        %v301 = vsel %vm291, %v287, 1326507024
        %v302 = vsel %vm290, %v284, %v301
        %v303 = vsel %vm289, %v300, %v302
        %v304 = vshll.u32 %v264, 8
        %v305 = vmul.u32.u64.compose %v304, %v303
        %v306 = vextract.low.u32 %v305
        %v307 = vextract.high.u32 %v305
        %v308 = vmul.u32.u64.compose %v304, %v299
        %v309 = vextract.low.u32 %v308
        %v310 = vextract.high.u32 %v308
        %v311 = vmul.u32 %v304, %v295
        %v312 = vadd.s32 %v307, %v309
        %vm313 = vc.u32 %v307, %v309
        %v314 = vadd.s32 %v310, 1
        %v315 = vsel %vm313, %v314, %v310
        %v316 = vadd.s32 %v311, %v315
        %v317 = vadd.s32 %v316, 536870912
        %v318 = vshrl.u32 %v317, 30
        %v319 = vshll.u32 %v318, 30
        %v320 = vsub.s32 %v316, %v319
        %vm321 = vcmp.lt.s32.totalorder %v320, 0
        %v322 = vsub.s32 0, %v320
        %v323 = vsel %vm321, %v322, %v320
        %v324 = vclz %v323
        %v325 = vsub.s32 %v324, 2
        %vm326 = vcmp.gt.s32.totalorder 0, %v325
        %v327 = vsel %vm326, 0, %v325
        %v328 = vsub.s32 32, %v327
        %v329 = vshll.u32 %v320, %v327
        %v330 = vshrl.u32 %v312, %v328
        %v331 = vor.u32 %v329, %v330
        %v332 = vsub.s32 4294967266, %v327
        %v333 = vadd.s32 %v332, 127
        %v334 = vshll.u32 %v333, 23
        %v335 = vor.u32 4788187, %v334
        %v336 = vand.u32 2147483647, %v335
        %v338 = vcvt.s32.f32 %v331
        %v339 = vmul.f32 %v338, %v336
        %v340 = vxor.u32 %v339, 2147483648
        %v341 = vsel %vm258, %v340, %v339
        %v342 = vsub.s32 4, %v318
        %v343 = vsel %vm258, %v342, %v318
        %v344 = vsel %vm257, %v150, %v341
        %v345 = vsel %vm257, 0, %v343
        %v346 = vcosq.f32.pop %v344
        %v347 = vsinq.f32.pop %v344
        %vm348 = vweird.f32 %v150
        %v349 = vand.u32 %v345, 3
        %vm350 = vcmp.lt.s32.totalorder %v349, 2
        %vm351 = vcmp.eq.s32.totalorder %v349, 0
        %v352 = vxor.u32 %v347, 2147483648
        %v353 = vsel %vm351, %v346, %v352
        %vm354 = vcmp.eq.s32.totalorder %v349, 2
        %v355 = vxor.u32 %v346, 2147483648
        %v356 = vsel %vm354, %v355, %v347
        %v357 = vsel %vm350, %v353, %v356
        %v358 = vsel %vm348, nan, %v357
        %s359 = scalar_lea.vmem %s148, 16 [#allocation5]
        %360 = vst [vmem:[%s359] sm:$0xff] %v358
        %v361 = vmul.f32 %v149, 402.12387
        %v362 = vand.u32 2147483647, %v361
        %vm363 = vcmp.le.f32.partialorder %v362, 0.7853982
        %vm364 = vcmp.lt.s32.totalorder %v361, 0
        %v365 = vand.u32 %v361, 2139095040
        %v366 = vshrl.u32 %v365, 23
        %v367 = vsub.s32 %v366, 127
        %v368 = vand.u32 2147483647, %v361
        %v369 = vand.u32 %v368, 8388607
        %v370 = vor.u32 %v369, 8388608
        %v371 = vsub.s32 0, %v370
        %v372 = vadd.s32 %v367, 1
        %vm373 = vcmp.gt.s32.totalorder %v372, 0
        %v374 = vsel %vm373, %v372, 0
        %v375 = vshrl.u32 %v374, 5
        %v376 = vand.u32 %v374, 31
        %v377 = vsub.s32 32, %v376
        %v378 = vshrl.u32 683565275, %v377
        %v379 = vshll.u32 683565275, %v376
        %v380 = vshrl.u32 2475754826, %v377
        %v381 = vor.u32 %v379, %v380
        %v382 = vshll.u32 2475754826, %v376
        %v383 = vshrl.u32 2131351028, %v377
        %v384 = vor.u32 %v382, %v383
        %v385 = vshll.u32 2131351028, %v376
        %v386 = vshrl.u32 2102212464, %v377
        %v387 = vor.u32 %v385, %v386
        %v388 = vshll.u32 2102212464, %v376
        %v389 = vshrl.u32 920167782, %v377
        %v390 = vor.u32 %v388, %v389
        %v391 = vshll.u32 920167782, %v376
        %v392 = vshrl.u32 1326507024, %v377
        %v393 = vor.u32 %v391, %v392
        %vm394 = vcmp.lt.s32.totalorder %v375, 1
        %vm395 = vcmp.lt.s32.totalorder %v375, 2
        %vm396 = vcmp.lt.s32.totalorder %v375, 3
        %vm397 = vcmp.lt.s32.totalorder %v375, 4
        %v398 = vsel %vm394, %v378, %v381
        %v399 = vsel %vm397, %v387, 2102212464
        %v400 = vsel %vm396, %v384, %v399
        %v401 = vsel %vm395, %v398, %v400
        %v402 = vsel %vm394, %v381, %v384
        %v403 = vsel %vm397, %v390, 920167782
        %v404 = vsel %vm396, %v387, %v403
        %v405 = vsel %vm395, %v402, %v404
        %v406 = vsel %vm394, %v384, %v387
        %v407 = vsel %vm397, %v393, 1326507024
        %v408 = vsel %vm396, %v390, %v407
        %v409 = vsel %vm395, %v406, %v408
        %v410 = vshll.u32 %v370, 8
        %v411 = vmul.u32.u64.compose %v410, %v409
        %v412 = vextract.low.u32 %v411
        %v413 = vextract.high.u32 %v411
        %v414 = vmul.u32.u64.compose %v410, %v405
        %v415 = vextract.low.u32 %v414
        %v416 = vextract.high.u32 %v414
        %v417 = vmul.u32 %v410, %v401
        %v418 = vadd.s32 %v413, %v415
        %vm419 = vc.u32 %v413, %v415
        %v420 = vadd.s32 %v416, 1
        %v421 = vsel %vm419, %v420, %v416
        %v422 = vadd.s32 %v417, %v421
        %v423 = vadd.s32 %v422, 536870912
        %v424 = vshrl.u32 %v423, 30
        %v425 = vshll.u32 %v424, 30
        %v426 = vsub.s32 %v422, %v425
        %vm427 = vcmp.lt.s32.totalorder %v426, 0
        %v428 = vsub.s32 0, %v426
        %v429 = vsel %vm427, %v428, %v426
        %v430 = vclz %v429
        %v431 = vsub.s32 %v430, 2
        %vm432 = vcmp.gt.s32.totalorder 0, %v431
        %v433 = vsel %vm432, 0, %v431
        %v434 = vsub.s32 32, %v433
        %v435 = vshll.u32 %v426, %v433
        %v436 = vshrl.u32 %v418, %v434
        %v437 = vor.u32 %v435, %v436
        %v438 = vsub.s32 4294967266, %v433
        %v439 = vadd.s32 %v438, 127
        %v440 = vshll.u32 %v439, 23
        %v441 = vor.u32 4788187, %v440
        %v442 = vand.u32 2147483647, %v441
        %v444 = vcvt.s32.f32 %v437
        %v445 = vmul.f32 %v444, %v442
        %v446 = vxor.u32 %v445, 2147483648
        %v447 = vsel %vm364, %v446, %v445
        %v448 = vsub.s32 4, %v424
        %v449 = vsel %vm364, %v448, %v424
        %v450 = vsel %vm363, %v361, %v447
        %v451 = vsel %vm363, 0, %v449
        %v452 = vcosq.f32.pop %v450
        %v453 = vsinq.f32.pop %v450
        %vm454 = vweird.f32 %v361
        %v455 = vadd.s32 %v451, 3
        %v456 = vand.u32 %v455, 3
        %vm457 = vcmp.lt.s32.totalorder %v456, 2
        %vm458 = vcmp.eq.s32.totalorder %v456, 0
        %v459 = vxor.u32 %v453, 2147483648
        %v460 = vsel %vm458, %v452, %v459
        %vm461 = vcmp.eq.s32.totalorder %v456, 2
        %v462 = vxor.u32 %v452, 2147483648
        %v463 = vsel %vm461, %v462, %v453
        %v464 = vsel %vm457, %v460, %v463
        %v465 = vsel %vm454, nan, %v464
        %s466 = scalar_lea.vmem %s148, 8 [#allocation5]
        %467 = vst [vmem:[%s466] sm:$0xff] %v465
        %v468 = vand.u32 2147483647, %v361
        %vm469 = vcmp.le.f32.partialorder %v468, 0.7853982
        %vm470 = vcmp.lt.s32.totalorder %v361, 0
        %v471 = vand.u32 %v361, 2139095040
        %v472 = vshrl.u32 %v471, 23
        %v473 = vsub.s32 %v472, 127
        %v474 = vand.u32 2147483647, %v361
        %v475 = vand.u32 %v474, 8388607
        %v476 = vor.u32 %v475, 8388608
        %v477 = vsub.s32 0, %v476
        %v478 = vadd.s32 %v473, 1
        %vm479 = vcmp.gt.s32.totalorder %v478, 0
        %v480 = vsel %vm479, %v478, 0
        %v481 = vshrl.u32 %v480, 5
        %v482 = vand.u32 %v480, 31
        %v483 = vsub.s32 32, %v482
        %v484 = vshrl.u32 683565275, %v483
        %v485 = vshll.u32 683565275, %v482
        %v486 = vshrl.u32 2475754826, %v483
        %v487 = vor.u32 %v485, %v486
        %v488 = vshll.u32 2475754826, %v482
        %v489 = vshrl.u32 2131351028, %v483
        %v490 = vor.u32 %v488, %v489
        %v491 = vshll.u32 2131351028, %v482
        %v492 = vshrl.u32 2102212464, %v483
        %v493 = vor.u32 %v491, %v492
        %v494 = vshll.u32 2102212464, %v482
        %v495 = vshrl.u32 920167782, %v483
        %v496 = vor.u32 %v494, %v495
        %v497 = vshll.u32 920167782, %v482
        %v498 = vshrl.u32 1326507024, %v483
        %v499 = vor.u32 %v497, %v498
        %vm500 = vcmp.lt.s32.totalorder %v481, 1
        %vm501 = vcmp.lt.s32.totalorder %v481, 2
        %vm502 = vcmp.lt.s32.totalorder %v481, 3
        %vm503 = vcmp.lt.s32.totalorder %v481, 4
        %v504 = vsel %vm500, %v484, %v487
        %v505 = vsel %vm503, %v493, 2102212464
        %v506 = vsel %vm502, %v490, %v505
        %v507 = vsel %vm501, %v504, %v506
        %v508 = vsel %vm500, %v487, %v490
        %v509 = vsel %vm503, %v496, 920167782
        %v510 = vsel %vm502, %v493, %v509
        %v511 = vsel %vm501, %v508, %v510
        %v512 = vsel %vm500, %v490, %v493
        %v513 = vsel %vm503, %v499, 1326507024
        %v514 = vsel %vm502, %v496, %v513
        %v515 = vsel %vm501, %v512, %v514
        %v516 = vshll.u32 %v476, 8
        %v517 = vmul.u32.u64.compose %v516, %v515
        %v518 = vextract.low.u32 %v517
        %v519 = vextract.high.u32 %v517
        %v520 = vmul.u32.u64.compose %v516, %v511
        %v521 = vextract.low.u32 %v520
        %v522 = vextract.high.u32 %v520
        %v523 = vmul.u32 %v516, %v507
        %v524 = vadd.s32 %v519, %v521
        %vm525 = vc.u32 %v519, %v521
        %v526 = vadd.s32 %v522, 1
        %v527 = vsel %vm525, %v526, %v522
        %v528 = vadd.s32 %v523, %v527
        %v529 = vadd.s32 %v528, 536870912
        %v530 = vshrl.u32 %v529, 30
        %v531 = vshll.u32 %v530, 30
        %v532 = vsub.s32 %v528, %v531
        %vm533 = vcmp.lt.s32.totalorder %v532, 0
        %v534 = vsub.s32 0, %v532
        %v535 = vsel %vm533, %v534, %v532
        %v536 = vclz %v535
        %v537 = vsub.s32 %v536, 2
        %vm538 = vcmp.gt.s32.totalorder 0, %v537
        %v539 = vsel %vm538, 0, %v537
        %v540 = vsub.s32 32, %v539
        %v541 = vshll.u32 %v532, %v539
        %v542 = vshrl.u32 %v524, %v540
        %v543 = vor.u32 %v541, %v542
        %v544 = vsub.s32 4294967266, %v539
        %v545 = vadd.s32 %v544, 127
        %v546 = vshll.u32 %v545, 23
        %v547 = vor.u32 4788187, %v546
        %v548 = vand.u32 2147483647, %v547
        %v550 = vcvt.s32.f32 %v543
        %v551 = vmul.f32 %v550, %v548
        %v552 = vxor.u32 %v551, 2147483648
        %v553 = vsel %vm470, %v552, %v551
        %v554 = vsub.s32 4, %v530
        %v555 = vsel %vm470, %v554, %v530
        %v556 = vsel %vm469, %v361, %v553
        %v557 = vsel %vm469, 0, %v555
        %v558 = vcosq.f32.pop %v556
        %v559 = vsinq.f32.pop %v556
        %vm560 = vweird.f32 %v361
        %v561 = vand.u32 %v557, 3
        %vm562 = vcmp.lt.s32.totalorder %v561, 2
        %vm563 = vcmp.eq.s32.totalorder %v561, 0
        %v564 = vxor.u32 %v559, 2147483648
        %v565 = vsel %vm563, %v558, %v564
        %vm566 = vcmp.eq.s32.totalorder %v561, 2
        %v567 = vxor.u32 %v558, 2147483648
        %v568 = vsel %vm566, %v567, %v559
        %v569 = vsel %vm562, %v565, %v568
        %v570 = vsel %vm560, nan, %v569
        %s571 = scalar_lea.vmem %s148, 24 [#allocation5]
        %572 = vst [vmem:[%s571] sm:$0xff] %v570
        %s573 = sand.u32 %s68, 1
        %s574 = scalar_lea.sflag [#allocation4], %s573
        %s575 = sand.u32 %s68, 1
        %s576 = smul.addr %s575, 32
        %s577 = scalar_lea.vmem [#allocation5], %s576
        // Predicated region
        $region29: #{tpu_custom_call.1} parent=23 // pred_check
          %p578 = pneg %p78
        $region30: #{tpu_custom_call.1} parent=23 // pred_check_branch
          %580 = sbr.rel (%p578) target = $region32
        $region31: #{tpu_custom_call.1} parent=23 // pred_region
          %s582 = ssub.s32 512, 512
          %583 = vsyncadd %s574, %s582
          %s584 = smul.addr %s22, 4
          %s585 = sadd.s32 %s23, %s584
          %s586 = smul.addr %s585, 128
          %s587 = scalar_lea.hbm %s1, %s586
          %s588 = sshll.u32 %s577, 4
          %s589 = int_to_ptr.vmem [resolvable:$true] %s588
          %594 = dma.vmem_to_hbm [thread:$0]  %s589, 512, %s587, %s574, 128, 128, 8
        $region32: #{tpu_custom_call.1} parent=23 // pred_fallthru
          _
      $region24: #{tpu_custom_call.1} parent=5 // pred_fallthru
        _
      %p595 = scmp.le.s32.totalorder 2, %s13
      // Predicated region
      $region33: #{tpu_custom_call.1} parent=5 // pred_check
        %p596 = pneg %p595
      $region34: #{tpu_custom_call.1} parent=5 // pred_check_branch
        %598 = sbr.rel (%p596) target = $region36
      $region35: #{tpu_custom_call.1} parent=5 // pred_region
        %s599 = ssub.s32 %s13, 2
        // Predicated region
        $region37: #{tpu_custom_call.1} parent=35 // pred_check
          %p600 = pneg %p84
        $region38: #{tpu_custom_call.1} parent=35 // pred_check_branch
          %602 = sbr.rel (%p600) target = $region40
        $region39: #{tpu_custom_call.1} parent=35 // pred_region
          %s603 = sand.u32 %s69, 1
          %s604 = scalar_lea.sflag [#allocation4], %s603
          %s605 = sand.u32 %s69, 1
          %s606 = smul.addr %s605, 32
          %s607 = scalar_lea.vmem [#allocation5], %s606
          %608 = dma.done %s604, 512
        $region40: #{tpu_custom_call.1} parent=35 // pred_fallthru
          _
      $region36: #{tpu_custom_call.1} parent=5 // pred_fallthru
        _
    $region6: #{tpu_custom_call.1} parent=1 // loop_footer
      %s17 = sadd.s32 1, %s13
    $region7: #{tpu_custom_call.1} parent=1 // loop_footer_branch
      %12 = sbr.rel target = $region3
    $region8: #{tpu_custom_call.1} parent=1 // loop_exit
      _
    %609 = vsyncpa [#allocation3], 1
    %s610 = scalar_lea.sflag [#allocation3], 1
    %611 = vsyncpa %s610, 1
    %612 = vsyncpa [#allocation4], 1
    %s613 = scalar_lea.sflag [#allocation4], 1
    %614 = vsyncpa %s613, 1

</llo_original>
